<compile_context>
chip_gen: v6e
topology: v6e:2x2x1
jax: 0.10.0
libtpu: 0.0.40
codegen_flags: <defaults>
</compile_context>

<pallas_src>
import functools

import jax
import jax.numpy as jnp
from jax import lax
from jax.experimental import pallas as pl
from jax.experimental.pallas import tpu as pltpu


def _round_up(x, m):
    return (x + m - 1) // m * m


# ----------------------------------------------------------------------------
# Tile-size selection (shared by init-time weight packing and runtime matmul)
# ----------------------------------------------------------------------------
_MAX_TK = 2048   # cap K tile: double-buffered working set stays ~4-6 MB (safe on v7x 64 MiB VMEM)


def _kn_tiles(K, N):
    Kp = _round_up(K, 128)
    tk = Kp if Kp <= _MAX_TK else _MAX_TK
    Kp = _round_up(Kp, tk)
    Np = _round_up(N, 128)
    tn = 256 if Np >= 512 else min(Np, 128)   # keep >=2 N blocks when N>=256 (v7x 2 cores)
    Np = _round_up(Np, tn)
    return Kp, Np, tk, tn


def _m_tiles(M):
    Mp = _round_up(M, 16)          # bf16 sublane packing
    tm = Mp if Mp <= 256 else 256
    Mp = _round_up(Mp, tm)
    return Mp, tm


# ----------------------------------------------------------------------------
# Pallas kernels
# ----------------------------------------------------------------------------
def _make_matmul_kernel(relu_in, relu_out):
    def kernel(a_ref, b_ref, scale_ref, shift_ref, o_ref, acc_ref):
        @pl.when(pl.program_id(2) == 0)
        def _():
            acc_ref[...] = jnp.zeros_like(acc_ref)

        a = a_ref[...]
        if relu_in:                                  # relu folded into the A-operand load
            a = jnp.maximum(a, jnp.zeros((), a.dtype))
        acc_ref[...] += jnp.dot(a, b_ref[...], preferred_element_type=jnp.float32)

        @pl.when(pl.program_id(2) == pl.num_programs(2) - 1)
        def _():
            y = acc_ref[...] * scale_ref[...] + shift_ref[...]
            if relu_out:
                y = jnp.maximum(y, 0.0)
            o_ref[...] = y.astype(o_ref.dtype)

    return kernel


def matmul_scale_shift(a, wmat, scale, shift, *, cout, relu_in, relu_out):
    """(M,K) patches x pre-padded bf16 weight (Kp,Np); fused scale/shift (+ReLU) epilogue."""
    M, K = a.shape
    Kp, Np, tk, tn = _kn_tiles(K, cout)
    assert wmat.shape == (Kp, Np), (wmat.shape, (Kp, Np))
    Mp, tm = _m_tiles(M)
    a = a.astype(jnp.bfloat16)
    if (Mp, Kp) != (M, K):
        a = jnp.pad(a, ((0, Mp - M), (0, Kp - K)))
    out = pl.pallas_call(
        _make_matmul_kernel(relu_in, relu_out),
        out_shape=jax.ShapeDtypeStruct((Mp, Np), jnp.bfloat16),
        grid_spec=pltpu.PrefetchScalarGridSpec(
            num_scalar_prefetch=0,
            grid=(Mp // tm, Np // tn, Kp // tk),
            in_specs=[
                pl.BlockSpec((tm, tk), lambda i, j, k: (i, k)),
                pl.BlockSpec((tk, tn), lambda i, j, k: (k, j)),
                pl.BlockSpec((1, tn), lambda i, j, k: (0, j)),
                pl.BlockSpec((1, tn), lambda i, j, k: (0, j)),
            ],
            out_specs=pl.BlockSpec((tm, tn), lambda i, j, k: (i, j)),
            scratch_shapes=[pltpu.VMEM((tm, tn), jnp.float32)],
        ),
        compiler_params=pltpu.CompilerParams(
            dimension_semantics=("parallel", "parallel", "arbitrary")),
    )(a, wmat, scale, shift)
    # TODO(synk): pl.Buffered(3) on the weight stream would further hide DMA latency on
    # the K-heavy deconvs but is skipped here for maximum JAX-version compatibility.
    return out[:M, :cout]


def _make_addn_kernel(n, relu, scale):
    def kernel(*refs):
        out_ref = refs[-1]
        acc = refs[0][...].astype(jnp.float32)
        for r in refs[1:n]:
            acc = acc + r[...].astype(jnp.float32)
        if scale != 1.0:
            acc = acc * scale
        if relu:
            acc = jnp.maximum(acc, 0.0)
        out_ref[...] = acc.astype(out_ref.dtype)

    return kernel


@functools.partial(jax.jit, static_argnames=("relu", "scale"))
def _ew_combine(arrays, *, relu, scale):
    """Elementwise sum of N same-shaped arrays (lane-dense (rows, C) layout)."""
    shape = arrays[0].shape
    C = shape[-1]
    M = arrays[0].size // C
    Cp = _round_up(C, 128)
    Mp = _round_up(M, 16)
    trows = Mp if Mp <= 256 else 256
    Mp = _round_up(Mp, trows)
    mats = []
    for a in arrays:
        m = a.reshape(M, C)
        if (Mp, Cp) != (M, C):
            m = jnp.pad(m, ((0, Mp - M), (0, Cp - C)))
        mats.append(m)
    out = pl.pallas_call(
        _make_addn_kernel(len(arrays), relu, scale),
        out_shape=jax.ShapeDtypeStruct((Mp, Cp), arrays[0].dtype),
        grid=(Mp // trows,),
        in_specs=[pl.BlockSpec((trows, Cp), lambda i: (i, 0))] * len(arrays),
        out_specs=pl.BlockSpec((trows, Cp), lambda i: (i, 0)),
    )(*mats)
    if (Mp, Cp) != (M, C):
        out = out[:M, :C]
    return out.reshape(shape)


def ew_combine(arrays, relu=False, scale=1.0):
    return _ew_combine(tuple(arrays), relu=bool(relu), scale=float(scale))


def _pool_mean_kernel(x_ref, o_ref):
    o_ref[...] = jnp.mean(x_ref[...], axis=0, keepdims=True)


@functools.partial(jax.jit, static_argnames=("ksize",))
def avg_pool3d(x, ksize):
    """AvgPool3d with kernel == stride (only used inside CVAE decoder_x)."""
    N, D, H, W, C = x.shape
    kd, kh, kw = ksize
    views = []
    for a in range(kd):
        for b in range(kh):
            for c in range(kw):
                views.append(x[:, a::kd, b::kh, c::kw, :].astype(jnp.float32).reshape(-1))
    stacked = jnp.stack(views, axis=0)
    R, M = stacked.shape
    tile = 512
    Mp = _round_up(M, tile)
    if Mp != M:
        stacked = jnp.pad(stacked, ((0, 0), (0, Mp - M)))
    pooled = pl.pallas_call(
        _pool_mean_kernel,
        out_shape=jax.ShapeDtypeStruct((1, Mp), jnp.float32),
        grid=(Mp // tile,),
        in_specs=[pl.BlockSpec((R, tile), lambda i: (0, i))],
        out_specs=pl.BlockSpec((1, tile), lambda i: (0, i)),
    )(stacked)
    return pooled[0, :M].reshape(N, D // kd, H // kh, W // kw, C).astype(x.dtype)


# ----------------------------------------------------------------------------
# Conv / deconv wrappers (glue = patch extraction; compute = Pallas)
# ----------------------------------------------------------------------------
@functools.partial(jax.jit, static_argnames=(
    "ksize", "cout", "relu_in", "relu_out", "stride", "padding", "dilation"))
def conv3d_bn_act(x, wmat, scale, shift, *, ksize, cout, relu_in, relu_out,
                  stride, padding, dilation):
    """x: (N,D,H,W,Cin) bf16; wmat: pre-padded (Kp,Np) bf16; BN/bias folded into scale/shift."""
    kd, kh, kw = ksize
    N, D, H, W, Cin = x.shape
    sd, sh, sw = stride
    pd, ph, pw = padding
    dd, dh, dw = dilation
    Do = (D + 2 * pd - dd * (kd - 1) - 1) // sd + 1
    Ho = (H + 2 * ph - dh * (kh - 1) - 1) // sh + 1
    Wo = (W + 2 * pw - dw * (kw - 1) - 1) // sw + 1
    if ksize == (1, 1, 1) and stride == (1, 1, 1) and padding == (0, 0, 0):
        patches = x.reshape(N * D * H * W, Cin)        # pointwise conv: no im2col at all
    else:
        # TODO(synk): im2col still materializes taps*Cin columns in HBM; a fully
        # VMEM-resident conv (pl.ds tap shifts inside the kernel) would remove this
        # remaining A-operand traffic at these small spatial sizes.
        xp = x
        if (pd, ph, pw) != (0, 0, 0):
            xp = jnp.pad(x, ((0, 0), (pd, pd), (ph, ph), (pw, pw), (0, 0)))
        taps = []
        for a in range(kd):
            for b in range(kh):
                for c in range(kw):
                    taps.append(xp[:, a * dd: a * dd + (Do - 1) * sd + 1: sd,
                                      b * dh: b * dh + (Ho - 1) * sh + 1: sh,
                                      c * dw: c * dw + (Wo - 1) * sw + 1: sw, :])
        patches = jnp.stack(taps, axis=-2).reshape(N * Do * Ho * Wo, kd * kh * kw * Cin)
    out = matmul_scale_shift(patches, wmat, scale, shift, cout=cout,
                             relu_in=relu_in, relu_out=relu_out)
    return out.reshape(N, Do, Ho, Wo, cout)


def run_conv(p, x, *, relu_in=False, relu_out=False,
             stride=(1, 1, 1), padding=(0, 0, 0), dilation=(1, 1, 1)):
    return conv3d_bn_act(x, p["wmat"], p["scale"], p["shift"],
                         ksize=p["ksize"], cout=p["cout"],
                         relu_in=relu_in, relu_out=relu_out,
                         stride=stride, padding=padding, dilation=dilation)


def run_deconv(p, x, *, relu_out=False, stride=2, padding=1, output_padding=1):
    """ConvTranspose3d(k=3,s=2,p=1,op=1) == zero-dilate input + regular conv with flipped weight."""
    k = p["ksize"][0]
    lo = k - 1 - padding
    hi = k - 1 - padding + output_padding
    s = stride
    xd = lax.pad(x, jnp.zeros((), x.dtype),
                 ((0, 0, 0), (lo, hi, s - 1), (lo, hi, s - 1), (lo, hi, s - 1), (0, 0, 0)))
    return conv3d_bn_act(xd, p["wmat"], p["scale"], p["shift"],
                         ksize=p["ksize"], cout=p["cout"],
                         relu_in=False, relu_out=relu_out,
                         stride=(1, 1, 1), padding=(0, 0, 0), dilation=(1, 1, 1))


# ----------------------------------------------------------------------------
# Deterministic parameter initialization (weights packed to MXU layout once)
# ----------------------------------------------------------------------------
BN_EPS = 1e-5
LATENT = 16    # config.lantent_size not provided -> CVAE default latent_size=16
SAMPLES = 2    # config.samples not provided -> 2


class ParamGen:
    def __init__(self, seed):
        self._key = jax.random.PRNGKey(seed)

    def next(self):
        self._key, sub = jax.random.split(self._key)
        return sub


def _bn_scale_shift(pg, c):
    # eval-mode BatchNorm: y = gamma*(x-mean)/sqrt(var+eps)+beta == scale*x + shift
    gamma = 1.0 + 0.1 * jax.random.normal(pg.next(), (c,), jnp.float32)
    beta = 0.1 * jax.random.normal(pg.next(), (c,), jnp.float32)
    r_mean = 0.1 * jax.random.normal(pg.next(), (c,), jnp.float32)
    r_var = 1.0 + 0.1 * jnp.abs(jax.random.normal(pg.next(), (c,), jnp.float32))
    scale = gamma / jnp.sqrt(r_var + BN_EPS)
    shift = beta - r_mean * scale
    return scale, shift


def _conv_w(pg, cout, cin, k):
    fan_in = cin * k[0] * k[1] * k[2]
    return jax.random.normal(pg.next(), (cout, cin) + tuple(k), jnp.float32) * (fan_in ** -0.5)


def _pack_conv(w, scale, shift):
    """Pre-transpose / zero-pad / bf16-cast a conv weight into MXU-ready layout (init-time)."""
    cout, cin, kd, kh, kw = w.shape
    K = kd * kh * kw * cin
    Kp, Np, _, _ = _kn_tiles(K, cout)
    wmat = jnp.transpose(w, (2, 3, 4, 1, 0)).reshape(K, cout)
    wmat = jnp.pad(wmat, ((0, Kp - K), (0, Np - cout))).astype(jnp.bfloat16)
    scale_p = jnp.pad(scale.reshape(1, cout).astype(jnp.float32), ((0, 0), (0, Np - cout)))
    shift_p = jnp.pad(shift.reshape(1, cout).astype(jnp.float32), ((0, 0), (0, Np - cout)))
    return {"wmat": wmat, "scale": scale_p, "shift": shift_p,
            "ksize": (kd, kh, kw), "cout": cout}


def make_cbn(pg, cin, cout, k):
    s, sh = _bn_scale_shift(pg, cout)
    return _pack_conv(_conv_w(pg, cout, cin, k), s, sh)


def make_conv_bias(pg, cin, cout, k):
    b = 0.05 * jax.random.normal(pg.next(), (cout,), jnp.float32)
    return _pack_conv(_conv_w(pg, cout, cin, k), jnp.ones((cout,), jnp.float32), b)


def make_pool_cbn(pg, cin, cout, pool):
    """AvgPool3d(kernel=stride=pool) -> Conv3d 1x1x1 -> BN, fused into ONE strided conv."""
    w1 = _conv_w(pg, cout, cin, (1, 1, 1))
    ps = float(pool[0] * pool[1] * pool[2])
    w = jnp.broadcast_to(w1, (cout, cin) + tuple(pool)) / ps
    s, sh = _bn_scale_shift(pg, cout)
    p = _pack_conv(w, s, sh)
    p["pool"] = tuple(pool)
    return p


def make_deconv_bn(pg, cin, cout):
    # PyTorch ConvTranspose3d weight (Cin,Cout,3,3,3) + bias, followed by BN.
    wt = jax.random.normal(pg.next(), (cin, cout, 3, 3, 3), jnp.float32) * ((cin * 27) ** -0.5)
    bias = 0.05 * jax.random.normal(pg.next(), (cout,), jnp.float32)
    s, sh = _bn_scale_shift(pg, cout)
    w_eq = jnp.transpose(jnp.flip(wt, axis=(2, 3, 4)), (1, 0, 2, 3, 4))  # equivalent conv weight
    return _pack_conv(w_eq, s, sh + s * bias)


# ----------------------------------------------------------------------------
# Bottleneck3D
# ----------------------------------------------------------------------------
# TODO(synk): Bottleneck3D source was not provided in the snippet; this follows the
# upstream TorchSSC Bottleneck3D (1x1 reduce -> (1,1,3)/(1,3,1)/(3,1,1) directional
# convs with lateral downsample adds -> 1x1 expand -> residual).  completion_layer1's
# downsample/inplanes channels (128 in the snippet) are normalized to `feature` so the
# residual additions are shape-consistent (as in upstream TorchSSC).
def make_bottleneck(pg, inplanes, planes, *, expansion=4, stride=1,
                    dilation=(1, 1, 1), downsample_cout=None):
    cfg = {"stride": stride, "dilation": tuple(dilation)}
    p = {
        "conv1": make_cbn(pg, inplanes, planes, (1, 1, 1)),
        "conv2": make_cbn(pg, planes, planes, (1, 1, 3)),
        "conv3": make_cbn(pg, planes, planes, (1, 3, 1)),
        "conv4": make_cbn(pg, planes, planes, (3, 1, 1)),
        "conv5": make_cbn(pg, planes, planes * expansion, (1, 1, 1)),
    }
    if downsample_cout is not None:
        p["downsample"] = make_pool_cbn(pg, inplanes, downsample_cout, (2, 2, 2))
    if stride != 1:
        p["downsample2"] = make_pool_cbn(pg, planes, planes, (1, stride, 1))
        p["downsample3"] = make_pool_cbn(pg, planes, planes, (stride, 1, 1))
        p["downsample4"] = make_pool_cbn(pg, planes, planes, (stride, 1, 1))
    return (cfg, p)


def bottleneck_forward(block, x):
    cfg, p = block
    s = cfg["stride"]
    d0, d1, d2 = cfg["dilation"]
    residual = x
    out1 = run_conv(p["conv1"], x, relu_out=True)
    out2 = run_conv(p["conv2"], out1, stride=(1, 1, s), padding=(0, 0, d0), dilation=(1, 1, d0))
    # ReLU(out2) folded into conv3's A-operand (out2 itself is reused pre-ReLU below).
    out3 = run_conv(p["conv3"], out2, relu_in=True,
                    stride=(1, s, 1), padding=(0, d1, 0), dilation=(1, d1, 1))
    if s != 1:
        out2 = run_conv(p["downsample2"], out2, stride=(1, s, 1))      # fused pool+1x1+BN
    out3 = ew_combine([out3, out2])
    out4 = run_conv(p["conv4"], out3, relu_in=True,
                    stride=(s, 1, 1), padding=(d2, 0, 0), dilation=(d2, 1, 1))
    if s != 1:
        out2 = run_conv(p["downsample3"], out2, stride=(s, 1, 1))      # fused pool+1x1+BN
        out3 = run_conv(p["downsample4"], out3, stride=(s, 1, 1))      # fused pool+1x1+BN
    out4s = ew_combine([out4, out2, out3])
    out5 = run_conv(p["conv5"], out4s, relu_in=True)
    if "downsample" in p:
        residual = run_conv(p["downsample"], x, stride=(2, 2, 2))      # fused pool+1x1+BN
    return ew_combine([out5, residual], relu=True)


# ----------------------------------------------------------------------------
# STAGE1 (+ CVAE eval branch)
# ----------------------------------------------------------------------------
def init_stage1(pg, feature=512):
    P = {}
    P["oper1"] = [make_cbn(pg, 1, 3, (3, 3, 3)),
                  make_cbn(pg, 3, 64, (3, 3, 3)),
                  make_cbn(pg, 64, 512, (3, 3, 3))]
    P["cl1"] = [
        make_bottleneck(pg, 512, feature // 4, expansion=4, stride=2, downsample_cout=feature),
        make_bottleneck(pg, feature, feature // 4, dilation=(1, 1, 1)),
        make_bottleneck(pg, feature, feature // 4, dilation=(2, 2, 2)),
        make_bottleneck(pg, feature, feature // 4, dilation=(3, 3, 3)),
    ]
    P["cl2"] = [
        make_bottleneck(pg, feature, feature // 4, expansion=8, stride=2,
                        downsample_cout=feature * 2),
        make_bottleneck(pg, feature * 2, feature // 2, dilation=(1, 1, 1)),
        make_bottleneck(pg, feature * 2, feature // 2, dilation=(2, 2, 2)),
        make_bottleneck(pg, feature * 2, feature // 2, dilation=(3, 3, 3)),
    ]
    P["cs0"] = make_deconv_bn(pg, feature * 2, feature)
    P["cs1"] = make_deconv_bn(pg, feature, feature)
    P["cs2"] = make_conv_bias(pg, feature, 2, (1, 1, 1))
    # CVAE -- eval path only (encoder / mean / log_var are unused when not training).
    P["cvae_decoder_x"] = [make_cbn(pg, 1, 3, (3, 3, 3)),
                           make_cbn(pg, 3, 16, (3, 3, 3)),
                           make_cbn(pg, 16, 16, (3, 3, 3)),
                           make_cbn(pg, 16, LATENT, (3, 3, 3)),
                           make_cbn(pg, LATENT, LATENT, (3, 3, 3))]
    P["cvae_decoder"] = {"deconv0": make_deconv_bn(pg, LATENT * 2, LATENT),
                         "deconv1": make_deconv_bn(pg, LATENT, LATENT),
                         "final": make_conv_bias(pg, LATENT, 2, (1, 1, 1))}
    return P


def cvae_eval_forward(P, x, key, samples=SAMPLES):
    # x: (N, D, H, W, 1) binary sketch; eval branch of CVAE.forward.
    dxp = P["cvae_decoder_x"]
    dx = run_conv(dxp[0], x, relu_out=True, padding=(1, 1, 1))
    dx = run_conv(dxp[1], dx, relu_out=True, padding=(1, 1, 1))
    dx = run_conv(dxp[2], dx, relu_out=True, padding=(1, 1, 1))
    dx = avg_pool3d(dx, (2, 2, 2))
    dx = run_conv(dxp[3], dx, relu_out=True, padding=(1, 1, 1))
    dx = avg_pool3d(dx, (2, 2, 2))
    dx = run_conv(dxp[4], dx, relu_out=True, padding=(1, 1, 1))
    # decoder_x is loop-invariant in eval mode, so it is computed once.
    outs = []
    for _ in range(samples):
        key, sub = jax.random.split(key)
        z = jax.random.normal(sub, dx.shape[:-1] + (LATENT,), jnp.float32).astype(jnp.bfloat16)
        h = jnp.concatenate([dx, z], axis=-1)
        h = run_deconv(P["cvae_decoder"]["deconv0"], h, relu_out=True)
        h = run_deconv(P["cvae_decoder"]["deconv1"], h, relu_out=True)
        # Dropout3d(0.1) is identity in eval mode.
        h = run_conv(P["cvae_decoder"]["final"], h)
        outs.append(h)
    sketch_gsnn = ew_combine(outs, scale=1.0 / samples)   # mean over samples
    return None, None, sketch_gsnn, None


def stage1_forward(P, tsdf, depth_mapping_3d=None, sketch_gt=None, *, key, samples=SAMPLES):
    # tsdf: (N, 1, D, H, W) NCDHW; depth_mapping_3d is accepted but unused (as in the reference).
    del depth_mapping_3d, sketch_gt
    x = jnp.transpose(tsdf, (0, 2, 3, 4, 1)).astype(jnp.bfloat16)  # -> NDHWC bf16
    t = run_conv(P["oper1"][0], x, relu_out=True, padding=(1, 1, 1))
    t = run_conv(P["oper1"][1], t, relu_out=True, padding=(1, 1, 1))
    t = run_conv(P["oper1"][2], t, relu_out=True, padding=(1, 1, 1))
    c1 = t
    for blk in P["cl1"]:
        c1 = bottleneck_forward(blk, c1)
    c2 = c1
    for blk in P["cl2"]:
        c2 = bottleneck_forward(blk, c2)
    up1 = run_deconv(P["cs0"], c2, relu_out=True)
    up1 = ew_combine([up1, c1])                    # up_sketch1 + completion1
    up2 = run_deconv(P["cs1"], up1, relu_out=True)
    # Dropout3d(0.1) in classify_sketch[2] is identity in eval mode.
    pred_sketch_raw = run_conv(P["cs2"], up2)
    # torch.max(dim=1, keepdim=True)[1] over 2 channels: 1 iff channel-1 strictly larger.
    pred_sketch_binary = (pred_sketch_raw[..., 1:2] > pred_sketch_raw[..., 0:1]).astype(jnp.bfloat16)
    pred_mean, pred_log_var, pred_sketch_gsnn, pred_sketch = cvae_eval_forward(
        P, pred_sketch_binary, key, samples)
    to_ncdhw = lambda a: jnp.transpose(a.astype(jnp.float32), (0, 4, 1, 2, 3))
    return (to_ncdhw(pred_sketch_raw),
            None if pred_sketch_gsnn is None else to_ncdhw(pred_sketch_gsnn),
            pred_sketch, pred_mean, pred_log_var)


if __name__ == "__main__":
    pg = ParamGen(0)
    params = init_stage1(pg, feature=512)

    key = jax.random.PRNGKey(0)
    k_in, k_z = jax.random.split(key)
    b, D, H, W = 1, 8, 8, 8
    tsdf = jax.random.normal(k_in, (b, 1, D, H, W), jnp.float32)
    depth_mapping_3d = jnp.zeros((b, D * H * W), jnp.int32)  # unused, kept for signature parity

    outs = stage1_forward(params, tsdf, depth_mapping_3d, key=k_z, samples=SAMPLES)
    pred_sketch_raw, pred_sketch_gsnn = outs[0], outs[1]
    jax.block_until_ready(pred_sketch_raw)
    jax.block_until_ready(pred_sketch_gsnn)
    assert pred_sketch_raw.shape == (b, 2, D, H, W)
    assert pred_sketch_gsnn.shape == (b, 2, D, H, W)
    assert outs[2] is None and outs[3] is None and outs[4] is None
    print("KERNEL_OK")
</pallas_src>

<mosaic_0001>
module attributes {stable_mosaic.version = 11 : i64} {
  func.func @kernel(%arg0: i32, %arg1: i32, %arg2: i32, %arg3: memref<256x128xbf16, #tpu.memory_space<vmem>>, %arg4: memref<128x128xbf16, #tpu.memory_space<vmem>>, %arg5: memref<1x128xf32, #tpu.memory_space<vmem>>, %arg6: memref<1x128xf32, #tpu.memory_space<vmem>>, %arg7: memref<256x128xbf16, #tpu.memory_space<vmem>>, %arg8: memref<256x128xf32, #tpu.memory_space<vmem>>) attributes {dimension_semantics = [#tpu.dimension_semantics<parallel>, #tpu.dimension_semantics<parallel>, #tpu.dimension_semantics<arbitrary>], iteration_bounds = array<i64: 2, 1, 1>, scalar_prefetch = 0 : i64, scratch_operands = 1 : i64, tpu.core_type = #tpu.core_type<tc>, window_params = [{transform_indices = @transform_0, window_bounds = array<i64: 256, 128>}, {transform_indices = @transform_1, window_bounds = array<i64: 128, 128>}, {transform_indices = @transform_2, window_bounds = array<i64: 1, 128>}, {transform_indices = @transform_3, window_bounds = array<i64: 1, 128>}, {transform_indices = @transform_4, window_bounds = array<i64: 256, 128>}]} {
    %c0_i32 = arith.constant 0 : i32
    %0 = arith.cmpi eq, %arg2, %c0_i32 : i32
    %1 = arith.extui %0 : i1 to i32
    %c0_i32_0 = arith.constant 0 : i32
    %2 = arith.cmpi ne, %1, %c0_i32_0 : i32
    scf.if %2 {
      %cst_10 = arith.constant 0.000000e+00 : f32
      %12 = vector.broadcast %cst_10 : f32 to vector<256x128xf32>
      %c0_11 = arith.constant 0 : index
      %c0_12 = arith.constant 0 : index
      %13 = vector.load %arg8[%c0_11, %c0_12] : memref<256x128xf32, #tpu.memory_space<vmem>>, vector<256x128xf32>
      tpu.vector_store %arg8[%c0_11, %c0_12], %12 {strides = array<i32>} : memref<256x128xf32, #tpu.memory_space<vmem>>, vector<256x128xf32>,
    } else {
    }
    %c0 = arith.constant 0 : index
    %c0_1 = arith.constant 0 : index
    %3 = vector.load %arg3[%c0, %c0_1] : memref<256x128xbf16, #tpu.memory_space<vmem>>, vector<256x128xbf16>
    %c0_2 = arith.constant 0 : index
    %c0_3 = arith.constant 0 : index
    %4 = vector.load %arg8[%c0_2, %c0_3] : memref<256x128xf32, #tpu.memory_space<vmem>>, vector<256x128xf32>
    %c0_4 = arith.constant 0 : index
    %c0_5 = arith.constant 0 : index
    %5 = vector.load %arg4[%c0_4, %c0_5] : memref<128x128xbf16, #tpu.memory_space<vmem>>, vector<128x128xbf16>
    %cst = arith.constant dense<0.000000e+00> : vector<256x128xf32>
    %6 = tpu.matmul %3, %5, %cst {dimension_numbers = #tpu.dot_dimension_numbers<[1], [0], [0], [1], [0, 0, 1, 1], [], []>} : vector<256x128xbf16>, vector<128x128xbf16>, vector<256x128xf32> -> vector<256x128xf32>
    %7 = arith.addf %4, %6 : vector<256x128xf32>
    %c0_6 = arith.constant 0 : index
    %c0_7 = arith.constant 0 : index
    %8 = vector.load %arg8[%c0_6, %c0_7] : memref<256x128xf32, #tpu.memory_space<vmem>>, vector<256x128xf32>
    tpu.vector_store %arg8[%c0_6, %c0_7], %7 {strides = array<i32>} : memref<256x128xf32, #tpu.memory_space<vmem>>, vector<256x128xf32>,
    %c0_i32_8 = arith.constant 0 : i32
    %9 = arith.cmpi eq, %arg2, %c0_i32_8 : i32
    %10 = arith.extui %9 : i1 to i32
    %c0_i32_9 = arith.constant 0 : i32
    %11 = arith.cmpi ne, %10, %c0_i32_9 : i32
    scf.if %11 {
      %c0_10 = arith.constant 0 : index
      %c0_11 = arith.constant 0 : index
      %12 = vector.load %arg8[%c0_10, %c0_11] : memref<256x128xf32, #tpu.memory_space<vmem>>, vector<256x128xf32>
      %c0_12 = arith.constant 0 : index
      %c0_13 = arith.constant 0 : index
      %13 = vector.load %arg5[%c0_12, %c0_13] : memref<1x128xf32, #tpu.memory_space<vmem>>, vector<1x128xf32>
      %14 = vector.broadcast %13 : vector<1x128xf32> to vector<256x128xf32>
      %15 = arith.mulf %12, %14 : vector<256x128xf32>
      %c0_14 = arith.constant 0 : index
      %c0_15 = arith.constant 0 : index
      %16 = vector.load %arg6[%c0_14, %c0_15] : memref<1x128xf32, #tpu.memory_space<vmem>>, vector<1x128xf32>
      %17 = vector.broadcast %16 : vector<1x128xf32> to vector<256x128xf32>
      %18 = arith.addf %15, %17 : vector<256x128xf32>
      %cst_16 = arith.constant 0.000000e+00 : f32
      %19 = vector.broadcast %cst_16 : f32 to vector<256x128xf32>
      %20 = arith.maximumf %18, %19 : vector<256x128xf32>
      %21 = arith.truncf %20 : vector<256x128xf32> to vector<256x128xbf16>
      %c0_17 = arith.constant 0 : index
      %c0_18 = arith.constant 0 : index
      %22 = vector.load %arg7[%c0_17, %c0_18] : memref<256x128xbf16, #tpu.memory_space<vmem>>, vector<256x128xbf16>
      tpu.vector_store %arg7[%c0_17, %c0_18], %21 {strides = array<i32>} : memref<256x128xbf16, #tpu.memory_space<vmem>>, vector<256x128xbf16>,
    } else {
    }
    return
  }
  func.func @transform_0(%arg0: i32, %arg1: i32, %arg2: i32) -> (i32, i32) {
    %c0_i32 = arith.constant 0 : i32
    return %arg0, %arg2 : i32, i32
  }
  func.func @transform_1(%arg0: i32, %arg1: i32, %arg2: i32) -> (i32, i32) {
    %c0_i32 = arith.constant 0 : i32
    return %arg2, %arg1 : i32, i32
  }
  func.func @transform_2(%arg0: i32, %arg1: i32, %arg2: i32) -> (i32, i32) {
    %c0_i32 = arith.constant 0 : i32
    %c0_i32_0 = arith.constant 0 : i32
    return %c0_i32, %arg1 : i32, i32
  }
  func.func @transform_3(%arg0: i32, %arg1: i32, %arg2: i32) -> (i32, i32) {
    %c0_i32 = arith.constant 0 : i32
    %c0_i32_0 = arith.constant 0 : i32
    return %c0_i32, %arg1 : i32, i32
  }
  func.func @transform_4(%arg0: i32, %arg1: i32, %arg2: i32) -> (i32, i32) {
    %c0_i32 = arith.constant 0 : i32
    return %arg0, %arg1 : i32, i32
  }
}

</mosaic_0001>

<llo_original>
// kernel: conv3d_bn_act.1
$region0: #{conv3d_bn_act.1}
  #allocation0 [shape = 'u32[]', space=smem, size = 0x4, offset = 0x4, fixed_abs, tag = 'smem constant byte address 0x4 - core index']
  #allocation1 [shape = 'u32[144,128]{1,0:T(1,128)}', space=vmem, size = 0x12000, scoped, tag = 'internal scratch']
  #allocation2 [shape = 'f32[256,128]{1,0:T(8,128)}', space=vmem, size = 0x20000, scoped, tag = 'scratch operand']
  %s0 = inlined_call_operand.vmem [shape: bf16[512,128], index: 0, kind: input, shape index: {}]
  %s1 = inlined_call_operand.vmem [shape: bf16[128,128], index: 1, kind: input, shape index: {}]
  %s2 = inlined_call_operand.vmem [shape: f32[1,128], index: 2, kind: input, shape index: {}]
  %s3 = inlined_call_operand.vmem [shape: f32[1,128], index: 3, kind: input, shape index: {}]
  %s4 = inlined_call_operand.vmem [shape: bf16[512,128], index: 4, kind: output, shape index: {}]
  %s5 = sld [smem:[#allocation0]]
  $region57: #{conv3d_bn_act.1} parent=0
    _
  %s7 = ssub.s32 1, %s5
  %s8 = scalar_select 0, %s7, %s5
  loop: start=0, step=1, limit=4
  $region2: #{conv3d_bn_act.1} parent=0 // loop_pre_header
    _
  $region3: #{conv3d_bn_act.1} parent=0 // loop_header
    %s10 = sphi 0, %s14
    %p11 = scmp.ge.s32.totalorder %s10, 4
    %s17 = sphi 0, %s36
    %s18 = sphi 0, %s32
    %s19 = sphi 0, %s28
    %s20 = sphi 0, %s17
    %s21 = sphi 0, %s18
    %s22 = sphi 0, %s19
    %s23 = sphi 0, %s20
    %s24 = sphi 0, %s21
    %s25 = sphi 0, %s22
    %s41 = sphi 0, %s43
    %s44 = sphi 0, %s41
    %s45 = sphi 0, %s44
    %s61 = sphi 0, %s45
    %s69 = sphi 0, %s71
    %s72 = sphi 0, %s69
    %s73 = sphi 0, %s72
    %s89 = sphi 0, %s73
    %s95 = sphi 0, %s97
    %s98 = sphi 0, %s95
    %s99 = sphi 0, %s98
    %s115 = sphi 0, %s99
    %s121 = sphi 0, %s123
    %s124 = sphi 0, %s121
    %s125 = sphi 0, %s124
    %s141 = sphi 0, %s125
    %s149 = sphi 0, %s151
    %s152 = sphi 0, %s149
    %s153 = sphi 0, %s152
    %s169 = sphi 0, %s153
  $region4: #{conv3d_bn_act.1} parent=0 // loop_header_branch
    %13 = sbr.rel (%p11) target = $region8
  $region5: #{conv3d_bn_act.1} parent=0 // loop_body
    %s15 = ssub.s32 %s10, 1
    %s16 = ssub.s32 %s10, 2
    %s26 = sadd.s32 1, %s19
    %p27 = scmp.ge.s32.totalorder %s26, 1
    %s28 = scalar_select %p27, 0, %s26
    %s29 = sadd.s32 1, %s18
    %s30 = scalar_select %p27, %s29, %s18
    %p31 = scmp.ge.s32.totalorder %s30, 1
    %s32 = scalar_select %p31, 0, %s30
    %s33 = sadd.s32 1, %s17
    %s34 = scalar_select %p31, %s33, %s17
    %p35 = scmp.ge.s32.totalorder %s34, 2
    %s36 = scalar_select %p35, 0, %s34
    %s37 = ssub.s32 %s17, %s36
    %s38 = ssub.s32 %s19, %s28
    %s39 = sor.u32 %s37, %s38
    %p40 = scmp.eq.s32.totalorder %s39, 0
    %s42 = sadd.s32 %s41, 1
    %s43 = scalar_select %p40, %s41, %s42
    %p46 = pneg %p40
    %p47 = scmp.eq.s32.totalorder %s10, 1
    %p48 = por %p46, %p47
    %p49 = scmp.ne.s32.totalorder %s41, %s44
    %p50 = scmp.eq.s32.totalorder %s10, 0
    %p51 = por %p49, %p50
    %p52 = scmp.ne.s32.totalorder %s41, %s44
    %p53 = scmp.eq.s32.totalorder %s15, 1
    %p54 = por %p52, %p53
    %p55 = scmp.ne.s32.totalorder %s44, %s45
    %p56 = scmp.eq.s32.totalorder %s15, 0
    %p57 = por %p55, %p56
    %p58 = scmp.ne.s32.totalorder %s44, %s45
    %p59 = scmp.eq.s32.totalorder %s16, 1
    %p60 = por %p58, %p59
    %p62 = scmp.ne.s32.totalorder %s45, %s61
    %p63 = scmp.eq.s32.totalorder %s16, 0
    %p64 = por %p62, %p63
    %s65 = ssub.s32 %s19, %s28
    %s66 = ssub.s32 %s18, %s32
    %s67 = sor.u32 %s65, %s66
    %p68 = scmp.eq.s32.totalorder %s67, 0
    %s70 = sadd.s32 %s69, 1
    %s71 = scalar_select %p68, %s69, %s70
    %p74 = pneg %p68
    %p75 = scmp.eq.s32.totalorder %s10, 1
    %p76 = por %p74, %p75
    %p77 = scmp.ne.s32.totalorder %s69, %s72
    %p78 = scmp.eq.s32.totalorder %s10, 0
    %p79 = por %p77, %p78
    %p80 = scmp.ne.s32.totalorder %s69, %s72
    %p81 = scmp.eq.s32.totalorder %s15, 1
    %p82 = por %p80, %p81
    %p83 = scmp.ne.s32.totalorder %s72, %s73
    %p84 = scmp.eq.s32.totalorder %s15, 0
    %p85 = por %p83, %p84
    %p86 = scmp.ne.s32.totalorder %s72, %s73
    %p87 = scmp.eq.s32.totalorder %s16, 1
    %p88 = por %p86, %p87
    %p90 = scmp.ne.s32.totalorder %s73, %s89
    %p91 = scmp.eq.s32.totalorder %s16, 0
    %p92 = por %p90, %p91
    %s93 = ssub.s32 %s18, %s32
    %p94 = scmp.eq.s32.totalorder %s93, 0
    %s96 = sadd.s32 %s95, 1
    %s97 = scalar_select %p94, %s95, %s96
    %p100 = pneg %p94
    %p101 = scmp.eq.s32.totalorder %s10, 1
    %p102 = por %p100, %p101
    %p103 = scmp.ne.s32.totalorder %s95, %s98
    %p104 = scmp.eq.s32.totalorder %s10, 0
    %p105 = por %p103, %p104
    %p106 = scmp.ne.s32.totalorder %s95, %s98
    %p107 = scmp.eq.s32.totalorder %s15, 1
    %p108 = por %p106, %p107
    %p109 = scmp.ne.s32.totalorder %s98, %s99
    %p110 = scmp.eq.s32.totalorder %s15, 0
    %p111 = por %p109, %p110
    %p112 = scmp.ne.s32.totalorder %s98, %s99
    %p113 = scmp.eq.s32.totalorder %s16, 1
    %p114 = por %p112, %p113
    %p116 = scmp.ne.s32.totalorder %s99, %s115
    %p117 = scmp.eq.s32.totalorder %s16, 0
    %p118 = por %p116, %p117
    %s119 = ssub.s32 %s18, %s32
    %p120 = scmp.eq.s32.totalorder %s119, 0
    %s122 = sadd.s32 %s121, 1
    %s123 = scalar_select %p120, %s121, %s122
    %p126 = pneg %p120
    %p127 = scmp.eq.s32.totalorder %s10, 1
    %p128 = por %p126, %p127
    %p129 = scmp.ne.s32.totalorder %s121, %s124
    %p130 = scmp.eq.s32.totalorder %s10, 0
    %p131 = por %p129, %p130
    %p132 = scmp.ne.s32.totalorder %s121, %s124
    %p133 = scmp.eq.s32.totalorder %s15, 1
    %p134 = por %p132, %p133
    %p135 = scmp.ne.s32.totalorder %s124, %s125
    %p136 = scmp.eq.s32.totalorder %s15, 0
    %p137 = por %p135, %p136
    %p138 = scmp.ne.s32.totalorder %s124, %s125
    %p139 = scmp.eq.s32.totalorder %s16, 1
    %p140 = por %p138, %p139
    %p142 = scmp.ne.s32.totalorder %s125, %s141
    %p143 = scmp.eq.s32.totalorder %s16, 0
    %p144 = por %p142, %p143
    %s145 = ssub.s32 %s17, %s36
    %s146 = ssub.s32 %s18, %s32
    %s147 = sor.u32 %s145, %s146
    %p148 = scmp.eq.s32.totalorder %s147, 0
    %s150 = sadd.s32 %s149, 1
    %s151 = scalar_select %p148, %s149, %s150
    %p154 = pneg %p148
    %p155 = scmp.eq.s32.totalorder %s10, 1
    %p156 = por %p154, %p155
    %p157 = scmp.ne.s32.totalorder %s149, %s152
    %p158 = scmp.eq.s32.totalorder %s10, 0
    %p159 = por %p157, %p158
    %p160 = scmp.ne.s32.totalorder %s149, %s152
    %p161 = scmp.eq.s32.totalorder %s15, 1
    %p162 = por %p160, %p161
    %p163 = scmp.ne.s32.totalorder %s152, %s153
    %p164 = scmp.eq.s32.totalorder %s15, 0
    %p165 = por %p163, %p164
    %p166 = scmp.ne.s32.totalorder %s152, %s153
    %p167 = scmp.eq.s32.totalorder %s16, 1
    %p168 = por %p166, %p167
    %p170 = scmp.ne.s32.totalorder %s153, %s169
    %p171 = scmp.eq.s32.totalorder %s16, 0
    %p172 = por %p170, %p171
    %p173 = scmp.le.s32.totalorder 1, %s10
    %p174 = scmp.lt.s32.totalorder %s10, 3
    %p175 = pnand %p173, %p174
    %p176 = pneg %p175
    // Predicated region
    $region9: #{conv3d_bn_act.1} parent=5 // pred_check
      _
    $region10: #{conv3d_bn_act.1} parent=5 // pred_check_branch
      %178 = sbr.rel (%p175) target = $region12
    $region11: #{conv3d_bn_act.1} parent=5 // pred_region
      %s179 = ssub.s32 %s10, 1
      // Predicated region
      $region13: #{conv3d_bn_act.1} parent=11 // pred_check
        %p180 = pneg %p85
      $region14: #{conv3d_bn_act.1} parent=11 // pred_check_branch
        %182 = sbr.rel (%p180) target = $region16
      $region15: #{conv3d_bn_act.1} parent=11 // pred_region
        %s183 = smul.u32 16, %s22
        %p184 = scmp.lt.s32.totalorder %s183, 15
        %s185 = scalar_select %p184, %s183, 15
        %p186 = scmp.lt.s32.totalorder %s21, 0
        %s187 = scalar_select %p186, %s21, 0
        %s188 = sadd.s32 %s187, %s185
        %s189 = smul.addr %s188, 4
        %s190 = scalar_lea.vmem %s1, %s189
        %s191 = smul.u32 16, %s22
      $region16: #{conv3d_bn_act.1} parent=11 // pred_fallthru
        _
      // Predicated region
      $region17: #{conv3d_bn_act.1} parent=11 // pred_check
        %p192 = pneg %p111
      $region18: #{conv3d_bn_act.1} parent=11 // pred_check_branch
        %194 = sbr.rel (%p192) target = $region20
      $region19: #{conv3d_bn_act.1} parent=11 // pred_region
        %p195 = scmp.lt.s32.totalorder %s21, 0
        %s196 = scalar_select %p195, %s21, 0
        %s197 = scalar_lea.vmem %s2, %s196
      $region20: #{conv3d_bn_act.1} parent=11 // pred_fallthru
        _
      // Predicated region
      $region21: #{conv3d_bn_act.1} parent=11 // pred_check
        %p198 = pneg %p137
      $region22: #{conv3d_bn_act.1} parent=11 // pred_check_branch
        %200 = sbr.rel (%p198) target = $region24
      $region23: #{conv3d_bn_act.1} parent=11 // pred_region
        %p201 = scmp.lt.s32.totalorder %s21, 0
        %s202 = scalar_select %p201, %s21, 0
        %s203 = scalar_lea.vmem %s3, %s202
      $region24: #{conv3d_bn_act.1} parent=11 // pred_fallthru
        _
    $region12: #{conv3d_bn_act.1} parent=5 // pred_fallthru
      _
    %p204 = scmp.lt.s32.totalorder %s10, 2
    // Predicated region
    $region25: #{conv3d_bn_act.1} parent=5 // pred_check
      %p205 = pneg %p204
    $region26: #{conv3d_bn_act.1} parent=5 // pred_check_branch
      %207 = sbr.rel (%p205) target = $region28
    $region27: #{conv3d_bn_act.1} parent=5 // pred_region
      // Predicated region
      $region29: #{conv3d_bn_act.1} parent=27 // pred_check
        %p208 = pneg %p51
      $region30: #{conv3d_bn_act.1} parent=27 // pred_check_branch
        %210 = sbr.rel (%p208) target = $region32
      $region31: #{conv3d_bn_act.1} parent=27 // pred_region
        %s211 = smul.u32 32, %s17
        %p212 = scmp.lt.s32.totalorder %s211, 63
        %s213 = scalar_select %p212, %s211, 63
        %p214 = scmp.lt.s32.totalorder %s19, 0
        %s215 = scalar_select %p214, %s19, 0
        %s216 = sadd.s32 %s215, %s213
        %s217 = smul.addr %s216, 4
        %s218 = scalar_lea.vmem %s0, %s217
        %s219 = smul.u32 32, %s17
      $region32: #{conv3d_bn_act.1} parent=27 // pred_fallthru
        _
    $region28: #{conv3d_bn_act.1} parent=5 // pred_fallthru
      _
    %p220 = scmp.le.s32.totalorder 1, %s10
    %p221 = scmp.lt.s32.totalorder %s10, 3
    %p222 = pnand %p220, %p221
    %p223 = pneg %p222
    // Predicated region
    $region33: #{conv3d_bn_act.1} parent=5 // pred_check
      _
    $region34: #{conv3d_bn_act.1} parent=5 // pred_check_branch
      %225 = sbr.rel (%p222) target = $region36
    $region35: #{conv3d_bn_act.1} parent=5 // pred_region
      %s226 = ssub.s32 %s10, 1
      %s227 = smul.u32 32, %s20
      %p228 = scmp.lt.s32.totalorder %s227, 63
      %s229 = scalar_select %p228, %s227, 63
      %p230 = scmp.lt.s32.totalorder %s22, 0
      %s231 = scalar_select %p230, %s22, 0
      %s232 = sadd.s32 %s231, %s229
      %s233 = smul.addr %s232, 4
      %s234 = scalar_lea.vmem %s0, %s233
      %p235 = pneg %p57
      %p236 = pneg %p54
      %s237 = smul.u32 16, %s22
      %p238 = scmp.lt.s32.totalorder %s237, 15
      %s239 = scalar_select %p238, %s237, 15
      %p240 = scmp.lt.s32.totalorder %s21, 0
      %s241 = scalar_select %p240, %s21, 0
      %s242 = sadd.s32 %s241, %s239
      %s243 = smul.addr %s242, 4
      %s244 = scalar_lea.vmem %s1, %s243
      %p245 = pneg %p85
      %p246 = pneg %p82
      %p247 = scmp.lt.s32.totalorder %s21, 0
      %s248 = scalar_select %p247, %s21, 0
      %s249 = scalar_lea.vmem %s2, %s248
      %p250 = pneg %p111
      %p251 = pneg %p108
      %p252 = scmp.lt.s32.totalorder %s21, 0
      %s253 = scalar_select %p252, %s21, 0
      %s254 = scalar_lea.vmem %s3, %s253
      %p255 = pneg %p137
      %p256 = pneg %p134
      %p257 = pneg %p165
      %p258 = pneg %p162
      %s259 = smul.u32 32, %s20
      %p260 = scmp.lt.s32.totalorder %s259, 63
      %s261 = scalar_select %p260, %s259, 63
      %p262 = scmp.lt.s32.totalorder %s21, 0
      %s263 = scalar_select %p262, %s21, 0
      %s264 = sadd.s32 %s263, %s261
      %s265 = smul.addr %s264, 4
      %s266 = scalar_lea.vmem %s4, %s265
      %s267 = smul.u32 32, %s20
      %p268 = scmp.lt.s32.totalorder %s267, 63
      %s269 = scalar_select %p268, %s267, 63
      %p270 = scmp.lt.s32.totalorder %s22, 0
      %s271 = scalar_select %p270, %s22, 0
      %s272 = sadd.s32 %s271, %s269
      %s273 = smul.addr %s272, 4
      %s274 = scalar_lea.vmem %s0, %s273
      %s275 = smul.u32 32, %s20
      %s276 = smul.u32 16, %s22
      %p277 = scmp.lt.s32.totalorder %s276, 15
      %s278 = scalar_select %p277, %s276, 15
      %p279 = scmp.lt.s32.totalorder %s21, 0
      %s280 = scalar_select %p279, %s21, 0
      %s281 = sadd.s32 %s280, %s278
      %s282 = smul.addr %s281, 4
      %s283 = scalar_lea.vmem %s1, %s282
      %s284 = smul.u32 16, %s22
      %p285 = scmp.lt.s32.totalorder %s21, 0
      %s286 = scalar_select %p285, %s21, 0
      %s287 = scalar_lea.vmem %s2, %s286
      %p288 = scmp.lt.s32.totalorder %s21, 0
      %s289 = scalar_select %p288, %s21, 0
      %s290 = scalar_lea.vmem %s3, %s289
      %s291 = smul.u32 32, %s20
      %p292 = scmp.lt.s32.totalorder %s291, 63
      %s293 = scalar_select %p292, %s291, 63
      %p294 = scmp.lt.s32.totalorder %s21, 0
      %s295 = scalar_select %p294, %s21, 0
      %s296 = sadd.s32 %s295, %s293
      %s297 = smul.addr %s296, 4
      %s298 = scalar_lea.vmem %s4, %s297
      %s299 = smul.u32 32, %s20
      %p301 = scmp.eq.s32.totalorder %s22, 0
      // Predicated region
      $region37: #{conv3d_bn_act.1} parent=35 // pred_check
        %p302 = pneg %p301
      $region38: #{conv3d_bn_act.1} parent=35 // pred_check_branch
        %304 = sbr.rel (%p302) target = $region40
      $region39: #{conv3d_bn_act.1} parent=35 // pred_region
        %305 = vst [vmem:[#allocation2] sm:$0xff] 0.0
        %306 = vst [vmem:[#allocation2 + $0x8] sm:$0xff] 0.0
        %307 = vst [vmem:[#allocation2 + $0x10] sm:$0xff] 0.0
        %308 = vst [vmem:[#allocation2 + $0x18] sm:$0xff] 0.0
        %309 = vst [vmem:[#allocation2 + $0x20] sm:$0xff] 0.0
        %310 = vst [vmem:[#allocation2 + $0x28] sm:$0xff] 0.0
        %311 = vst [vmem:[#allocation2 + $0x30] sm:$0xff] 0.0
        %312 = vst [vmem:[#allocation2 + $0x38] sm:$0xff] 0.0
        %313 = vst [vmem:[#allocation2 + $0x40] sm:$0xff] 0.0
        %314 = vst [vmem:[#allocation2 + $0x48] sm:$0xff] 0.0
        %315 = vst [vmem:[#allocation2 + $0x50] sm:$0xff] 0.0
        %316 = vst [vmem:[#allocation2 + $0x58] sm:$0xff] 0.0
        %317 = vst [vmem:[#allocation2 + $0x60] sm:$0xff] 0.0
        %318 = vst [vmem:[#allocation2 + $0x68] sm:$0xff] 0.0
        %319 = vst [vmem:[#allocation2 + $0x70] sm:$0xff] 0.0
        %320 = vst [vmem:[#allocation2 + $0x78] sm:$0xff] 0.0
        %321 = vst [vmem:[#allocation2 + $0x80] sm:$0xff] 0.0
        %322 = vst [vmem:[#allocation2 + $0x88] sm:$0xff] 0.0
        %323 = vst [vmem:[#allocation2 + $0x90] sm:$0xff] 0.0
        %324 = vst [vmem:[#allocation2 + $0x98] sm:$0xff] 0.0
        %325 = vst [vmem:[#allocation2 + $0xa0] sm:$0xff] 0.0
        %326 = vst [vmem:[#allocation2 + $0xa8] sm:$0xff] 0.0
        %327 = vst [vmem:[#allocation2 + $0xb0] sm:$0xff] 0.0
        %328 = vst [vmem:[#allocation2 + $0xb8] sm:$0xff] 0.0
        %329 = vst [vmem:[#allocation2 + $0xc0] sm:$0xff] 0.0
        %330 = vst [vmem:[#allocation2 + $0xc8] sm:$0xff] 0.0
        %331 = vst [vmem:[#allocation2 + $0xd0] sm:$0xff] 0.0
        %332 = vst [vmem:[#allocation2 + $0xd8] sm:$0xff] 0.0
        %333 = vst [vmem:[#allocation2 + $0xe0] sm:$0xff] 0.0
        %334 = vst [vmem:[#allocation2 + $0xe8] sm:$0xff] 0.0
        %335 = vst [vmem:[#allocation2 + $0xf0] sm:$0xff] 0.0
        %336 = vst [vmem:[#allocation2 + $0xf8] sm:$0xff] 0.0
      $region40: #{conv3d_bn_act.1} parent=35 // pred_fallthru
        _
      %v337 = vld [vmem:[%s274] sm:$0xf]
      %v338 = vld [vmem:[%s274 + $0x4] sm:$0xf]
      %v339 = vld [vmem:[%s274 + $0x8] sm:$0xf]
      %v340 = vld [vmem:[%s274 + $0xc] sm:$0xf]
      %v341 = vld [vmem:[%s274 + $0x10] sm:$0xf]
      %v342 = vld [vmem:[%s274 + $0x14] sm:$0xf]
      %v343 = vld [vmem:[%s274 + $0x18] sm:$0xf]
      %v344 = vld [vmem:[%s274 + $0x1c] sm:$0xf]
      %v345 = vld [vmem:[%s274 + $0x20] sm:$0xf]
      %v346 = vld [vmem:[%s274 + $0x24] sm:$0xf]
      %v347 = vld [vmem:[%s274 + $0x28] sm:$0xf]
      %v348 = vld [vmem:[%s274 + $0x2c] sm:$0xf]
      %v349 = vld [vmem:[%s274 + $0x30] sm:$0xf]
      %v350 = vld [vmem:[%s274 + $0x34] sm:$0xf]
      %v351 = vld [vmem:[%s274 + $0x38] sm:$0xf]
      %v352 = vld [vmem:[%s274 + $0x3c] sm:$0xf]
      %v353 = vld [vmem:[%s274 + $0x40] sm:$0xf]
      %v354 = vld [vmem:[%s274 + $0x44] sm:$0xf]
      %v355 = vld [vmem:[%s274 + $0x48] sm:$0xf]
      %v356 = vld [vmem:[%s274 + $0x4c] sm:$0xf]
      %v357 = vld [vmem:[%s274 + $0x50] sm:$0xf]
      %v358 = vld [vmem:[%s274 + $0x54] sm:$0xf]
      %v359 = vld [vmem:[%s274 + $0x58] sm:$0xf]
      %v360 = vld [vmem:[%s274 + $0x5c] sm:$0xf]
      %v361 = vld [vmem:[%s274 + $0x60] sm:$0xf]
      %v362 = vld [vmem:[%s274 + $0x64] sm:$0xf]
      %v363 = vld [vmem:[%s274 + $0x68] sm:$0xf]
      %v364 = vld [vmem:[%s274 + $0x6c] sm:$0xf]
      %v365 = vld [vmem:[%s274 + $0x70] sm:$0xf]
      %v366 = vld [vmem:[%s274 + $0x74] sm:$0xf]
      %v367 = vld [vmem:[%s274 + $0x78] sm:$0xf]
      %v368 = vld [vmem:[%s274 + $0x7c] sm:$0xf]
      %v369 = vld [vmem:[#allocation2] sm:$0xff]
      %v370 = vld [vmem:[#allocation2 + $0x8] sm:$0xff]
      %v371 = vld [vmem:[#allocation2 + $0x10] sm:$0xff]
      %v372 = vld [vmem:[#allocation2 + $0x18] sm:$0xff]
      %v373 = vld [vmem:[#allocation2 + $0x20] sm:$0xff]
      %v374 = vld [vmem:[#allocation2 + $0x28] sm:$0xff]
      %v375 = vld [vmem:[#allocation2 + $0x30] sm:$0xff]
      %v376 = vld [vmem:[#allocation2 + $0x38] sm:$0xff]
      %v377 = vld [vmem:[#allocation2 + $0x40] sm:$0xff]
      %v378 = vld [vmem:[#allocation2 + $0x48] sm:$0xff]
      %v379 = vld [vmem:[#allocation2 + $0x50] sm:$0xff]
      %v380 = vld [vmem:[#allocation2 + $0x58] sm:$0xff]
      %v381 = vld [vmem:[#allocation2 + $0x60] sm:$0xff]
      %v382 = vld [vmem:[#allocation2 + $0x68] sm:$0xff]
      %v383 = vld [vmem:[#allocation2 + $0x70] sm:$0xff]
      %v384 = vld [vmem:[#allocation2 + $0x78] sm:$0xff]
      %v385 = vld [vmem:[#allocation2 + $0x80] sm:$0xff]
      %v386 = vld [vmem:[#allocation2 + $0x88] sm:$0xff]
      %v387 = vld [vmem:[#allocation2 + $0x90] sm:$0xff]
      %v388 = vld [vmem:[#allocation2 + $0x98] sm:$0xff]
      %v389 = vld [vmem:[#allocation2 + $0xa0] sm:$0xff]
      %v390 = vld [vmem:[#allocation2 + $0xa8] sm:$0xff]
      %v391 = vld [vmem:[#allocation2 + $0xb0] sm:$0xff]
      %v392 = vld [vmem:[#allocation2 + $0xb8] sm:$0xff]
      %v393 = vld [vmem:[#allocation2 + $0xc0] sm:$0xff]
      %v394 = vld [vmem:[#allocation2 + $0xc8] sm:$0xff]
      %v395 = vld [vmem:[#allocation2 + $0xd0] sm:$0xff]
      %v396 = vld [vmem:[#allocation2 + $0xd8] sm:$0xff]
      %v397 = vld [vmem:[#allocation2 + $0xe0] sm:$0xff]
      %v398 = vld [vmem:[#allocation2 + $0xe8] sm:$0xff]
      %v399 = vld [vmem:[#allocation2 + $0xf0] sm:$0xff]
      %v400 = vld [vmem:[#allocation2 + $0xf8] sm:$0xff]
      %v401 = vld [vmem:[%s283] sm:$0xf]
      %v402 = vld [vmem:[%s283 + $0x4] sm:$0xf]
      %v403 = vld [vmem:[%s283 + $0x8] sm:$0xf]
      %v404 = vld [vmem:[%s283 + $0xc] sm:$0xf]
      %v405 = vld [vmem:[%s283 + $0x10] sm:$0xf]
      %v406 = vld [vmem:[%s283 + $0x14] sm:$0xf]
      %v407 = vld [vmem:[%s283 + $0x18] sm:$0xf]
      %v408 = vld [vmem:[%s283 + $0x1c] sm:$0xf]
      %v409 = vld [vmem:[%s283 + $0x20] sm:$0xf]
      %v410 = vld [vmem:[%s283 + $0x24] sm:$0xf]
      %v411 = vld [vmem:[%s283 + $0x28] sm:$0xf]
      %v412 = vld [vmem:[%s283 + $0x2c] sm:$0xf]
      %v413 = vld [vmem:[%s283 + $0x30] sm:$0xf]
      %v414 = vld [vmem:[%s283 + $0x34] sm:$0xf]
      %v415 = vld [vmem:[%s283 + $0x38] sm:$0xf]
      %v416 = vld [vmem:[%s283 + $0x3c] sm:$0xf]
      %v449 = vunpack.c.l.b16 %v337
      %v450 = vunpack.c.l.b16 %v338
      %v451 = vunpack.c.l.b16 %v339
      %v452 = vunpack.c.l.b16 %v340
      %v453 = vunpack.c.l.b16 %v341
      %v454 = vunpack.c.l.b16 %v342
      %v455 = vunpack.c.l.b16 %v343
      %v456 = vunpack.c.l.b16 %v344
      %v457 = vunpack.c.l.b16 %v345
      %v458 = vunpack.c.l.b16 %v346
      %v459 = vunpack.c.l.b16 %v347
      %v460 = vunpack.c.l.b16 %v348
      %v461 = vunpack.c.l.b16 %v349
      %v462 = vunpack.c.l.b16 %v350
      %v463 = vunpack.c.l.b16 %v351
      %v464 = vunpack.c.l.b16 %v352
      %v465 = vunpack.c.l.b16 %v353
      %v466 = vunpack.c.l.b16 %v354
      %v467 = vunpack.c.l.b16 %v355
      %v468 = vunpack.c.l.b16 %v356
      %v469 = vunpack.c.l.b16 %v357
      %v470 = vunpack.c.l.b16 %v358
      %v471 = vunpack.c.l.b16 %v359
      %v472 = vunpack.c.l.b16 %v360
      %v473 = vunpack.c.l.b16 %v361
      %v474 = vunpack.c.l.b16 %v362
      %v475 = vunpack.c.l.b16 %v363
      %v476 = vunpack.c.l.b16 %v364
      %v477 = vunpack.c.l.b16 %v365
      %v478 = vunpack.c.l.b16 %v366
      %v479 = vunpack.c.l.b16 %v367
      %v480 = vunpack.c.l.b16 %v368
      %v481 = vpack.c.b16 %v450, %v449
      %v482 = vpack.c.b16 %v452, %v451
      %v483 = vpack.c.b16 %v454, %v453
      %v484 = vpack.c.b16 %v456, %v455
      %v485 = vpack.c.b16 %v458, %v457
      %v486 = vpack.c.b16 %v460, %v459
      %v487 = vpack.c.b16 %v462, %v461
      %v488 = vpack.c.b16 %v464, %v463
      %v489 = vpack.c.b16 %v466, %v465
      %v490 = vpack.c.b16 %v468, %v467
      %v491 = vpack.c.b16 %v470, %v469
      %v492 = vpack.c.b16 %v472, %v471
      %v493 = vpack.c.b16 %v474, %v473
      %v494 = vpack.c.b16 %v476, %v475
      %v495 = vpack.c.b16 %v478, %v477
      %v496 = vpack.c.b16 %v480, %v479
      %v529 = vunpack.c.l.b16 %v401
      %v530 = vunpack.c.l.b16 %v402
      %v531 = vunpack.c.l.b16 %v403
      %v532 = vunpack.c.l.b16 %v404
      %v533 = vunpack.c.l.b16 %v405
      %v534 = vunpack.c.l.b16 %v406
      %v535 = vunpack.c.l.b16 %v407
      %v536 = vunpack.c.l.b16 %v408
      %v537 = vunpack.c.l.b16 %v409
      %v538 = vunpack.c.l.b16 %v410
      %v539 = vunpack.c.l.b16 %v411
      %v540 = vunpack.c.l.b16 %v412
      %v541 = vunpack.c.l.b16 %v413
      %v542 = vunpack.c.l.b16 %v414
      %v543 = vunpack.c.l.b16 %v415
      %v544 = vunpack.c.l.b16 %v416
      %v545 = vpack.c.b16 %v530, %v529
      %v546 = vpack.c.b16 %v532, %v531
      %v547 = vpack.c.b16 %v534, %v533
      %v548 = vpack.c.b16 %v536, %v535
      %v549 = vpack.c.b16 %v538, %v537
      %v550 = vpack.c.b16 %v540, %v539
      %v551 = vpack.c.b16 %v542, %v541
      %v552 = vpack.c.b16 %v544, %v543
      %561 = vmatprep.subr.bf16.mxu0 0
      %562 = vmatpush1.bf16.msra.mxu0 %v552
      %563 = vmatprep.subr.bf16.mxu0 0
      %564 = vmatpush1.bf16.msra.mxu0 %v551
      %565 = vmatprep.subr.bf16.mxu0 0
      %566 = vmatpush1.bf16.msra.mxu0 %v550
      %567 = vmatprep.subr.bf16.mxu0 0
      %568 = vmatpush1.bf16.msra.mxu0 %v549
      %569 = vmatprep.subr.bf16.mxu0 0
      %570 = vmatpush1.bf16.msra.mxu0 %v548
      %571 = vmatprep.subr.bf16.mxu0 0
      %572 = vmatpush1.bf16.msra.mxu0 %v547
      %573 = vmatprep.subr.bf16.mxu0 0
      %574 = vmatpush1.bf16.msra.mxu0 %v546
      %575 = vmatprep.subr.bf16.mxu0 0
      %576 = vmatpush1.bf16.msra.mxu0 %v545
      %577 = vmatprep.subr.bf16.mxu0 0
      %578 = vmatpush2.bf16.msra.mxu0 0
      %579 = vmatprep.subr.bf16.mxu0 0
      %580 = vmatpush2.bf16.msra.mxu0 0
      %581 = vmatprep.subr.bf16.mxu0 0
      %582 = vmatpush2.bf16.msra.mxu0 0
      %583 = vmatprep.subr.bf16.mxu0 0
      %584 = vmatpush2.bf16.msra.mxu0 0
      %585 = vmatprep.subr.bf16.mxu0 0
      %586 = vmatpush2.bf16.msra.mxu0 0
      %587 = vmatprep.subr.bf16.mxu0 0
      %588 = vmatpush2.bf16.msra.mxu0 0
      %589 = vmatprep.subr.bf16.mxu0 0
      %590 = vmatpush2.bf16.msra.mxu0 0
      %591 = vmatprep.subr.bf16.mxu0 0
      %592 = vmatpush2.bf16.msra.mxu0 0
      %593 = vmatprep.mubr.bf16.mxu0 0
      %594 = vmatmul.mubr.bf16.gmra.mxu0 %v481
      %v595 = vpop.f32.mrf.mxu0
      %v596 = vadd.f32 0.0, %v595
      %v597 = vpop.f32.mrf.mxu0
      %v598 = vpop.f32.mrf.mxu0
      %v599 = vadd.f32 0.0, %v598
      %v600 = vpop.f32.mrf.mxu0
      %601 = vmatprep.mubr.bf16.mxu0 0
      %602 = vmatmul.mubr.bf16.gmra.mxu0 %v482
      %v603 = vpop.f32.mrf.mxu0
      %v604 = vadd.f32 0.0, %v603
      %v605 = vpop.f32.mrf.mxu0
      %v606 = vpop.f32.mrf.mxu0
      %v607 = vadd.f32 0.0, %v606
      %v608 = vpop.f32.mrf.mxu0
      %609 = vmatprep.mubr.bf16.mxu0 0
      %610 = vmatmul.mubr.bf16.gmra.mxu0 %v483
      %v611 = vpop.f32.mrf.mxu0
      %v612 = vadd.f32 0.0, %v611
      %v613 = vpop.f32.mrf.mxu0
      %v614 = vpop.f32.mrf.mxu0
      %v615 = vadd.f32 0.0, %v614
      %v616 = vpop.f32.mrf.mxu0
      %617 = vmatprep.mubr.bf16.mxu0 0
      %618 = vmatmul.mubr.bf16.gmra.mxu0 %v484
      %v619 = vpop.f32.mrf.mxu0
      %v620 = vadd.f32 0.0, %v619
      %v621 = vpop.f32.mrf.mxu0
      %v622 = vpop.f32.mrf.mxu0
      %v623 = vadd.f32 0.0, %v622
      %v624 = vpop.f32.mrf.mxu0
      %625 = vmatprep.mubr.bf16.mxu0 0
      %626 = vmatmul.mubr.bf16.gmra.mxu0 %v485
      %v627 = vpop.f32.mrf.mxu0
      %v628 = vadd.f32 0.0, %v627
      %v629 = vpop.f32.mrf.mxu0
      %v630 = vpop.f32.mrf.mxu0
      %v631 = vadd.f32 0.0, %v630
      %v632 = vpop.f32.mrf.mxu0
      %633 = vmatprep.mubr.bf16.mxu0 0
      %634 = vmatmul.mubr.bf16.gmra.mxu0 %v486
      %v635 = vpop.f32.mrf.mxu0
      %v636 = vadd.f32 0.0, %v635
      %v637 = vpop.f32.mrf.mxu0
      %v638 = vpop.f32.mrf.mxu0
      %v639 = vadd.f32 0.0, %v638
      %v640 = vpop.f32.mrf.mxu0
      %641 = vmatprep.mubr.bf16.mxu0 0
      %642 = vmatmul.mubr.bf16.gmra.mxu0 %v487
      %v643 = vpop.f32.mrf.mxu0
      %v644 = vadd.f32 0.0, %v643
      %v645 = vpop.f32.mrf.mxu0
      %v646 = vpop.f32.mrf.mxu0
      %v647 = vadd.f32 0.0, %v646
      %v648 = vpop.f32.mrf.mxu0
      %649 = vmatprep.mubr.bf16.mxu0 0
      %650 = vmatmul.mubr.bf16.gmra.mxu0 %v488
      %v651 = vpop.f32.mrf.mxu0
      %v652 = vadd.f32 0.0, %v651
      %v653 = vpop.f32.mrf.mxu0
      %v654 = vpop.f32.mrf.mxu0
      %v655 = vadd.f32 0.0, %v654
      %v656 = vpop.f32.mrf.mxu0
      %657 = vmatprep.mubr.bf16.mxu0 0
      %658 = vmatmul.mubr.bf16.gmra.mxu0 %v489
      %v659 = vpop.f32.mrf.mxu0
      %v660 = vadd.f32 0.0, %v659
      %v661 = vpop.f32.mrf.mxu0
      %v662 = vpop.f32.mrf.mxu0
      %v663 = vadd.f32 0.0, %v662
      %v664 = vpop.f32.mrf.mxu0
      %665 = vmatprep.mubr.bf16.mxu0 0
      %666 = vmatmul.mubr.bf16.gmra.mxu0 %v490
      %v667 = vpop.f32.mrf.mxu0
      %v668 = vadd.f32 0.0, %v667
      %v669 = vpop.f32.mrf.mxu0
      %v670 = vpop.f32.mrf.mxu0
      %v671 = vadd.f32 0.0, %v670
      %v672 = vpop.f32.mrf.mxu0
      %673 = vmatprep.mubr.bf16.mxu0 0
      %674 = vmatmul.mubr.bf16.gmra.mxu0 %v491
      %v675 = vpop.f32.mrf.mxu0
      %v676 = vadd.f32 0.0, %v675
      %v677 = vpop.f32.mrf.mxu0
      %v678 = vpop.f32.mrf.mxu0
      %v679 = vadd.f32 0.0, %v678
      %v680 = vpop.f32.mrf.mxu0
      %681 = vmatprep.mubr.bf16.mxu0 0
      %682 = vmatmul.mubr.bf16.gmra.mxu0 %v492
      %v683 = vpop.f32.mrf.mxu0
      %v684 = vadd.f32 0.0, %v683
      %v685 = vpop.f32.mrf.mxu0
      %v686 = vpop.f32.mrf.mxu0
      %v687 = vadd.f32 0.0, %v686
      %v688 = vpop.f32.mrf.mxu0
      %689 = vmatprep.mubr.bf16.mxu0 0
      %690 = vmatmul.mubr.bf16.gmra.mxu0 %v493
      %v691 = vpop.f32.mrf.mxu0
      %v692 = vadd.f32 0.0, %v691
      %v693 = vpop.f32.mrf.mxu0
      %v694 = vpop.f32.mrf.mxu0
      %v695 = vadd.f32 0.0, %v694
      %v696 = vpop.f32.mrf.mxu0
      %697 = vmatprep.mubr.bf16.mxu0 0
      %698 = vmatmul.mubr.bf16.gmra.mxu0 %v494
      %v699 = vpop.f32.mrf.mxu0
      %v700 = vadd.f32 0.0, %v699
      %v701 = vpop.f32.mrf.mxu0
      %v702 = vpop.f32.mrf.mxu0
      %v703 = vadd.f32 0.0, %v702
      %v704 = vpop.f32.mrf.mxu0
      %705 = vmatprep.mubr.bf16.mxu0 0
      %706 = vmatmul.mubr.bf16.gmra.mxu0 %v495
      %v707 = vpop.f32.mrf.mxu0
      %v708 = vadd.f32 0.0, %v707
      %v709 = vpop.f32.mrf.mxu0
      %v710 = vpop.f32.mrf.mxu0
      %v711 = vadd.f32 0.0, %v710
      %v712 = vpop.f32.mrf.mxu0
      %713 = vmatprep.mubr.bf16.mxu0 0
      %714 = vmatmul.mubr.bf16.gmra.mxu0 %v496
      %v715 = vpop.f32.mrf.mxu0
      %v716 = vadd.f32 0.0, %v715
      %v717 = vpop.f32.mrf.mxu0
      %v718 = vpop.f32.mrf.mxu0
      %v719 = vadd.f32 0.0, %v718
      %v720 = vpop.f32.mrf.mxu0
      %721 = vdwg.mxu0
      %v722 = vadd.f32 %v369, %v596
      %v723 = vadd.f32 %v370, %v599
      %v724 = vadd.f32 %v371, %v604
      %v725 = vadd.f32 %v372, %v607
      %v726 = vadd.f32 %v373, %v612
      %v727 = vadd.f32 %v374, %v615
      %v728 = vadd.f32 %v375, %v620
      %v729 = vadd.f32 %v376, %v623
      %v730 = vadd.f32 %v377, %v628
      %v731 = vadd.f32 %v378, %v631
      %v732 = vadd.f32 %v379, %v636
      %v733 = vadd.f32 %v380, %v639
      %v734 = vadd.f32 %v381, %v644
      %v735 = vadd.f32 %v382, %v647
      %v736 = vadd.f32 %v383, %v652
      %v737 = vadd.f32 %v384, %v655
      %v738 = vadd.f32 %v385, %v660
      %v739 = vadd.f32 %v386, %v663
      %v740 = vadd.f32 %v387, %v668
      %v741 = vadd.f32 %v388, %v671
      %v742 = vadd.f32 %v389, %v676
      %v743 = vadd.f32 %v390, %v679
      %v744 = vadd.f32 %v391, %v684
      %v745 = vadd.f32 %v392, %v687
      %v746 = vadd.f32 %v393, %v692
      %v747 = vadd.f32 %v394, %v695
      %v748 = vadd.f32 %v395, %v700
      %v749 = vadd.f32 %v396, %v703
      %v750 = vadd.f32 %v397, %v708
      %v751 = vadd.f32 %v398, %v711
      %v752 = vadd.f32 %v399, %v716
      %v753 = vadd.f32 %v400, %v719
      %754 = vst [vmem:[#allocation2] sm:$0xff] %v722
      %755 = vst [vmem:[#allocation2 + $0x8] sm:$0xff] %v723
      %756 = vst [vmem:[#allocation2 + $0x10] sm:$0xff] %v724
      %757 = vst [vmem:[#allocation2 + $0x18] sm:$0xff] %v725
      %758 = vst [vmem:[#allocation2 + $0x20] sm:$0xff] %v726
      %759 = vst [vmem:[#allocation2 + $0x28] sm:$0xff] %v727
      %760 = vst [vmem:[#allocation2 + $0x30] sm:$0xff] %v728
      %761 = vst [vmem:[#allocation2 + $0x38] sm:$0xff] %v729
      %762 = vst [vmem:[#allocation2 + $0x40] sm:$0xff] %v730
      %763 = vst [vmem:[#allocation2 + $0x48] sm:$0xff] %v731
      %764 = vst [vmem:[#allocation2 + $0x50] sm:$0xff] %v732
      %765 = vst [vmem:[#allocation2 + $0x58] sm:$0xff] %v733
      %766 = vst [vmem:[#allocation2 + $0x60] sm:$0xff] %v734
      %767 = vst [vmem:[#allocation2 + $0x68] sm:$0xff] %v735
      %768 = vst [vmem:[#allocation2 + $0x70] sm:$0xff] %v736
      %769 = vst [vmem:[#allocation2 + $0x78] sm:$0xff] %v737
      %770 = vst [vmem:[#allocation2 + $0x80] sm:$0xff] %v738
      %771 = vst [vmem:[#allocation2 + $0x88] sm:$0xff] %v739
      %772 = vst [vmem:[#allocation2 + $0x90] sm:$0xff] %v740
      %773 = vst [vmem:[#allocation2 + $0x98] sm:$0xff] %v741
      %774 = vst [vmem:[#allocation2 + $0xa0] sm:$0xff] %v742
      %775 = vst [vmem:[#allocation2 + $0xa8] sm:$0xff] %v743
      %776 = vst [vmem:[#allocation2 + $0xb0] sm:$0xff] %v744
      %777 = vst [vmem:[#allocation2 + $0xb8] sm:$0xff] %v745
      %778 = vst [vmem:[#allocation2 + $0xc0] sm:$0xff] %v746
      %779 = vst [vmem:[#allocation2 + $0xc8] sm:$0xff] %v747
      %780 = vst [vmem:[#allocation2 + $0xd0] sm:$0xff] %v748
      %781 = vst [vmem:[#allocation2 + $0xd8] sm:$0xff] %v749
      %782 = vst [vmem:[#allocation2 + $0xe0] sm:$0xff] %v750
      %783 = vst [vmem:[#allocation2 + $0xe8] sm:$0xff] %v751
      %784 = vst [vmem:[#allocation2 + $0xf0] sm:$0xff] %v752
      %785 = vst [vmem:[#allocation2 + $0xf8] sm:$0xff] %v753
      // Predicated region
      $region41: #{conv3d_bn_act.1} parent=35 // pred_check
        %p786 = pneg %p301
      $region42: #{conv3d_bn_act.1} parent=35 // pred_check_branch
        %788 = sbr.rel (%p786) target = $region44
      $region43: #{conv3d_bn_act.1} parent=35 // pred_region
        %v789 = vld [vmem:[#allocation2] sm:$0xff]
        %v790 = vld [vmem:[#allocation2 + $0x8] sm:$0xff]
        %v791 = vld [vmem:[#allocation2 + $0x10] sm:$0xff]
        %v792 = vld [vmem:[#allocation2 + $0x18] sm:$0xff]
        %v793 = vld [vmem:[#allocation2 + $0x20] sm:$0xff]
        %v794 = vld [vmem:[#allocation2 + $0x28] sm:$0xff]
        %v795 = vld [vmem:[#allocation2 + $0x30] sm:$0xff]
        %v796 = vld [vmem:[#allocation2 + $0x38] sm:$0xff]
        %v797 = vld [vmem:[#allocation2 + $0x40] sm:$0xff]
        %v798 = vld [vmem:[#allocation2 + $0x48] sm:$0xff]
        %v799 = vld [vmem:[#allocation2 + $0x50] sm:$0xff]
        %v800 = vld [vmem:[#allocation2 + $0x58] sm:$0xff]
        %v801 = vld [vmem:[#allocation2 + $0x60] sm:$0xff]
        %v802 = vld [vmem:[#allocation2 + $0x68] sm:$0xff]
        %v803 = vld [vmem:[#allocation2 + $0x70] sm:$0xff]
        %v804 = vld [vmem:[#allocation2 + $0x78] sm:$0xff]
        %v805 = vld [vmem:[#allocation2 + $0x80] sm:$0xff]
        %v806 = vld [vmem:[#allocation2 + $0x88] sm:$0xff]
        %v807 = vld [vmem:[#allocation2 + $0x90] sm:$0xff]
        %v808 = vld [vmem:[#allocation2 + $0x98] sm:$0xff]
        %v809 = vld [vmem:[#allocation2 + $0xa0] sm:$0xff]
        %v810 = vld [vmem:[#allocation2 + $0xa8] sm:$0xff]
        %v811 = vld [vmem:[#allocation2 + $0xb0] sm:$0xff]
        %v812 = vld [vmem:[#allocation2 + $0xb8] sm:$0xff]
        %v813 = vld [vmem:[#allocation2 + $0xc0] sm:$0xff]
        %v814 = vld [vmem:[#allocation2 + $0xc8] sm:$0xff]
        %v815 = vld [vmem:[#allocation2 + $0xd0] sm:$0xff]
        %v816 = vld [vmem:[#allocation2 + $0xd8] sm:$0xff]
        %v817 = vld [vmem:[#allocation2 + $0xe0] sm:$0xff]
        %v818 = vld [vmem:[#allocation2 + $0xe8] sm:$0xff]
        %v819 = vld [vmem:[#allocation2 + $0xf0] sm:$0xff]
        %v820 = vld [vmem:[#allocation2 + $0xf8] sm:$0xff]
        %v821 = vld [vmem:[%s287] sm:$0x1]
        %v823 = vlaneseq
        %v824 = vshrl.u32 %v823, 7
        %v825 = vsub.s32 0, %v824
        %v826 = vrot.slane %v821, %v825
        %v828 = vmul.f32 %v789, %v826
        %v829 = vmul.f32 %v790, %v826
        %v830 = vmul.f32 %v791, %v826
        %v831 = vmul.f32 %v792, %v826
        %v832 = vmul.f32 %v793, %v826
        %v833 = vmul.f32 %v794, %v826
        %v834 = vmul.f32 %v795, %v826
        %v835 = vmul.f32 %v796, %v826
        %v836 = vmul.f32 %v797, %v826
        %v837 = vmul.f32 %v798, %v826
        %v838 = vmul.f32 %v799, %v826
        %v839 = vmul.f32 %v800, %v826
        %v840 = vmul.f32 %v801, %v826
        %v841 = vmul.f32 %v802, %v826
        %v842 = vmul.f32 %v803, %v826
        %v843 = vmul.f32 %v804, %v826
        %v844 = vmul.f32 %v805, %v826
        %v845 = vmul.f32 %v806, %v826
        %v846 = vmul.f32 %v807, %v826
        %v847 = vmul.f32 %v808, %v826
        %v848 = vmul.f32 %v809, %v826
        %v849 = vmul.f32 %v810, %v826
        %v850 = vmul.f32 %v811, %v826
        %v851 = vmul.f32 %v812, %v826
        %v852 = vmul.f32 %v813, %v826
        %v853 = vmul.f32 %v814, %v826
        %v854 = vmul.f32 %v815, %v826
        %v855 = vmul.f32 %v816, %v826
        %v856 = vmul.f32 %v817, %v826
        %v857 = vmul.f32 %v818, %v826
        %v858 = vmul.f32 %v819, %v826
        %v859 = vmul.f32 %v820, %v826
        %v860 = vld [vmem:[%s290] sm:$0x1]
        %v862 = vlaneseq
        %v863 = vshrl.u32 %v862, 7
        %v864 = vsub.s32 0, %v863
        %v865 = vrot.slane %v860, %v864
        %v867 = vadd.f32 %v828, %v865
        %v868 = vadd.f32 %v829, %v865
        %v869 = vadd.f32 %v830, %v865
        %v870 = vadd.f32 %v831, %v865
        %v871 = vadd.f32 %v832, %v865
        %v872 = vadd.f32 %v833, %v865
        %v873 = vadd.f32 %v834, %v865
        %v874 = vadd.f32 %v835, %v865
        %v875 = vadd.f32 %v836, %v865
        %v876 = vadd.f32 %v837, %v865
        %v877 = vadd.f32 %v838, %v865
        %v878 = vadd.f32 %v839, %v865
        %v879 = vadd.f32 %v840, %v865
        %v880 = vadd.f32 %v841, %v865
        %v881 = vadd.f32 %v842, %v865
        %v882 = vadd.f32 %v843, %v865
        %v883 = vadd.f32 %v844, %v865
        %v884 = vadd.f32 %v845, %v865
        %v885 = vadd.f32 %v846, %v865
        %v886 = vadd.f32 %v847, %v865
        %v887 = vadd.f32 %v848, %v865
        %v888 = vadd.f32 %v849, %v865
        %v889 = vadd.f32 %v850, %v865
        %v890 = vadd.f32 %v851, %v865
        %v891 = vadd.f32 %v852, %v865
        %v892 = vadd.f32 %v853, %v865
        %v893 = vadd.f32 %v854, %v865
        %v894 = vadd.f32 %v855, %v865
        %v895 = vadd.f32 %v856, %v865
        %v896 = vadd.f32 %v857, %v865
        %v897 = vadd.f32 %v858, %v865
        %v898 = vadd.f32 %v859, %v865
        %v899 = vmax.f32 %v867, 0.0
        %v900 = vmax.f32 %v868, 0.0
        %v901 = vmax.f32 %v869, 0.0
        %v902 = vmax.f32 %v870, 0.0
        %v903 = vmax.f32 %v871, 0.0
        %v904 = vmax.f32 %v872, 0.0
        %v905 = vmax.f32 %v873, 0.0
        %v906 = vmax.f32 %v874, 0.0
        %v907 = vmax.f32 %v875, 0.0
        %v908 = vmax.f32 %v876, 0.0
        %v909 = vmax.f32 %v877, 0.0
        %v910 = vmax.f32 %v878, 0.0
        %v911 = vmax.f32 %v879, 0.0
        %v912 = vmax.f32 %v880, 0.0
        %v913 = vmax.f32 %v881, 0.0
        %v914 = vmax.f32 %v882, 0.0
        %v915 = vmax.f32 %v883, 0.0
        %v916 = vmax.f32 %v884, 0.0
        %v917 = vmax.f32 %v885, 0.0
        %v918 = vmax.f32 %v886, 0.0
        %v919 = vmax.f32 %v887, 0.0
        %v920 = vmax.f32 %v888, 0.0
        %v921 = vmax.f32 %v889, 0.0
        %v922 = vmax.f32 %v890, 0.0
        %v923 = vmax.f32 %v891, 0.0
        %v924 = vmax.f32 %v892, 0.0
        %v925 = vmax.f32 %v893, 0.0
        %v926 = vmax.f32 %v894, 0.0
        %v927 = vmax.f32 %v895, 0.0
        %v928 = vmax.f32 %v896, 0.0
        %v929 = vmax.f32 %v897, 0.0
        %v930 = vmax.f32 %v898, 0.0
        %v931 = vpack.c.bf16 %v900, %v899
        %v932 = vpack.c.bf16 %v902, %v901
        %v933 = vpack.c.bf16 %v904, %v903
        %v934 = vpack.c.bf16 %v906, %v905
        %v935 = vpack.c.bf16 %v908, %v907
        %v936 = vpack.c.bf16 %v910, %v909
        %v937 = vpack.c.bf16 %v912, %v911
        %v938 = vpack.c.bf16 %v914, %v913
        %v939 = vpack.c.bf16 %v916, %v915
        %v940 = vpack.c.bf16 %v918, %v917
        %v941 = vpack.c.bf16 %v920, %v919
        %v942 = vpack.c.bf16 %v922, %v921
        %v943 = vpack.c.bf16 %v924, %v923
        %v944 = vpack.c.bf16 %v926, %v925
        %v945 = vpack.c.bf16 %v928, %v927
        %v946 = vpack.c.bf16 %v930, %v929
        %v963 = vunpack.c.l.b16 %v931
        %v964 = vunpack.c.h.b16 %v931
        %v965 = vunpack.c.l.b16 %v932
        %v966 = vunpack.c.h.b16 %v932
        %v967 = vunpack.c.l.b16 %v933
        %v968 = vunpack.c.h.b16 %v933
        %v969 = vunpack.c.l.b16 %v934
        %v970 = vunpack.c.h.b16 %v934
        %v971 = vunpack.c.l.b16 %v935
        %v972 = vunpack.c.h.b16 %v935
        %v973 = vunpack.c.l.b16 %v936
        %v974 = vunpack.c.h.b16 %v936
        %v975 = vunpack.c.l.b16 %v937
        %v976 = vunpack.c.h.b16 %v937
        %v977 = vunpack.c.l.b16 %v938
        %v978 = vunpack.c.h.b16 %v938
        %v979 = vunpack.c.l.b16 %v939
        %v980 = vunpack.c.h.b16 %v939
        %v981 = vunpack.c.l.b16 %v940
        %v982 = vunpack.c.h.b16 %v940
        %v983 = vunpack.c.l.b16 %v941
        %v984 = vunpack.c.h.b16 %v941
        %v985 = vunpack.c.l.b16 %v942
        %v986 = vunpack.c.h.b16 %v942
        %v987 = vunpack.c.l.b16 %v943
        %v988 = vunpack.c.h.b16 %v943
        %v989 = vunpack.c.l.b16 %v944
        %v990 = vunpack.c.h.b16 %v944
        %v991 = vunpack.c.l.b16 %v945
        %v992 = vunpack.c.h.b16 %v945
        %v993 = vunpack.c.l.b16 %v946
        %v994 = vunpack.c.h.b16 %v946
        %v995 = vpack.c.b16 %v963, %v963
        %v996 = vpack.c.b16 %v964, %v964
        %v997 = vpack.c.b16 %v965, %v965
        %v998 = vpack.c.b16 %v966, %v966
        %v999 = vpack.c.b16 %v967, %v967
        %v1000 = vpack.c.b16 %v968, %v968
        %v1001 = vpack.c.b16 %v969, %v969
        %v1002 = vpack.c.b16 %v970, %v970
        %v1003 = vpack.c.b16 %v971, %v971
        %v1004 = vpack.c.b16 %v972, %v972
        %v1005 = vpack.c.b16 %v973, %v973
        %v1006 = vpack.c.b16 %v974, %v974
        %v1007 = vpack.c.b16 %v975, %v975
        %v1008 = vpack.c.b16 %v976, %v976
        %v1009 = vpack.c.b16 %v977, %v977
        %v1010 = vpack.c.b16 %v978, %v978
        %v1011 = vpack.c.b16 %v979, %v979
        %v1012 = vpack.c.b16 %v980, %v980
        %v1013 = vpack.c.b16 %v981, %v981
        %v1014 = vpack.c.b16 %v982, %v982
        %v1015 = vpack.c.b16 %v983, %v983
        %v1016 = vpack.c.b16 %v984, %v984
        %v1017 = vpack.c.b16 %v985, %v985
        %v1018 = vpack.c.b16 %v986, %v986
        %v1019 = vpack.c.b16 %v987, %v987
        %v1020 = vpack.c.b16 %v988, %v988
        %v1021 = vpack.c.b16 %v989, %v989
        %v1022 = vpack.c.b16 %v990, %v990
        %v1023 = vpack.c.b16 %v991, %v991
        %v1024 = vpack.c.b16 %v992, %v992
        %v1025 = vpack.c.b16 %v993, %v993
        %v1026 = vpack.c.b16 %v994, %v994
        %1059 = vst [vmem:[%s298] sm:$0xf] %v995
        %1060 = vst [vmem:[%s298 + $0x4] sm:$0xf] %v996
        %1061 = vst [vmem:[%s298 + $0x8] sm:$0xf] %v997
        %1062 = vst [vmem:[%s298 + $0xc] sm:$0xf] %v998
        %1063 = vst [vmem:[%s298 + $0x10] sm:$0xf] %v999
        %1064 = vst [vmem:[%s298 + $0x14] sm:$0xf] %v1000
        %1065 = vst [vmem:[%s298 + $0x18] sm:$0xf] %v1001
        %1066 = vst [vmem:[%s298 + $0x1c] sm:$0xf] %v1002
        %1067 = vst [vmem:[%s298 + $0x20] sm:$0xf] %v1003
        %1068 = vst [vmem:[%s298 + $0x24] sm:$0xf] %v1004
        %1069 = vst [vmem:[%s298 + $0x28] sm:$0xf] %v1005
        %1070 = vst [vmem:[%s298 + $0x2c] sm:$0xf] %v1006
        %1071 = vst [vmem:[%s298 + $0x30] sm:$0xf] %v1007
        %1072 = vst [vmem:[%s298 + $0x34] sm:$0xf] %v1008
        %1073 = vst [vmem:[%s298 + $0x38] sm:$0xf] %v1009
        %1074 = vst [vmem:[%s298 + $0x3c] sm:$0xf] %v1010
        %1075 = vst [vmem:[%s298 + $0x40] sm:$0xf] %v1011
        %1076 = vst [vmem:[%s298 + $0x44] sm:$0xf] %v1012
        %1077 = vst [vmem:[%s298 + $0x48] sm:$0xf] %v1013
        %1078 = vst [vmem:[%s298 + $0x4c] sm:$0xf] %v1014
        %1079 = vst [vmem:[%s298 + $0x50] sm:$0xf] %v1015
        %1080 = vst [vmem:[%s298 + $0x54] sm:$0xf] %v1016
        %1081 = vst [vmem:[%s298 + $0x58] sm:$0xf] %v1017
        %1082 = vst [vmem:[%s298 + $0x5c] sm:$0xf] %v1018
        %1083 = vst [vmem:[%s298 + $0x60] sm:$0xf] %v1019
        %1084 = vst [vmem:[%s298 + $0x64] sm:$0xf] %v1020
        %1085 = vst [vmem:[%s298 + $0x68] sm:$0xf] %v1021
        %1086 = vst [vmem:[%s298 + $0x6c] sm:$0xf] %v1022
        %1087 = vst [vmem:[%s298 + $0x70] sm:$0xf] %v1023
        %1088 = vst [vmem:[%s298 + $0x74] sm:$0xf] %v1024
        %1089 = vst [vmem:[%s298 + $0x78] sm:$0xf] %v1025
        %1090 = vst [vmem:[%s298 + $0x7c] sm:$0xf] %v1026
      $region44: #{conv3d_bn_act.1} parent=35 // pred_fallthru
        _
      %s1091 = smul.u32 32, %s20
      %p1092 = scmp.lt.s32.totalorder %s1091, 63
      %s1093 = scalar_select %p1092, %s1091, 63
      %p1094 = scmp.lt.s32.totalorder %s21, 0
      %s1095 = scalar_select %p1094, %s21, 0
      %s1096 = sadd.s32 %s1095, %s1093
      %s1097 = smul.addr %s1096, 4
      %s1098 = scalar_lea.vmem %s4, %s1097
      // Predicated region
      $region45: #{conv3d_bn_act.1} parent=35 // pred_check
        %p1099 = pneg %p162
      $region46: #{conv3d_bn_act.1} parent=35 // pred_check_branch
        %1101 = sbr.rel (%p1099) target = $region48
      $region47: #{conv3d_bn_act.1} parent=35 // pred_region
        %s1102 = smul.u32 32, %s20
      $region48: #{conv3d_bn_act.1} parent=35 // pred_fallthru
        _
    $region36: #{conv3d_bn_act.1} parent=5 // pred_fallthru
      _
    %p1103 = scmp.le.s32.totalorder 2, %s10
    // Predicated region
    $region49: #{conv3d_bn_act.1} parent=5 // pred_check
      %p1104 = pneg %p1103
    $region50: #{conv3d_bn_act.1} parent=5 // pred_check_branch
      %1106 = sbr.rel (%p1104) target = $region52
    $region51: #{conv3d_bn_act.1} parent=5 // pred_region
      %s1107 = ssub.s32 %s10, 2
      // Predicated region
      $region53: #{conv3d_bn_act.1} parent=51 // pred_check
        %p1108 = pneg %p168
      $region54: #{conv3d_bn_act.1} parent=51 // pred_check_branch
        %1110 = sbr.rel (%p1108) target = $region56
      $region55: #{conv3d_bn_act.1} parent=51 // pred_region
        %s1111 = smul.u32 32, %s23
        %p1112 = scmp.lt.s32.totalorder %s1111, 63
        %s1113 = scalar_select %p1112, %s1111, 63
        %p1114 = scmp.lt.s32.totalorder %s24, 0
        %s1115 = scalar_select %p1114, %s24, 0
        %s1116 = sadd.s32 %s1115, %s1113
        %s1117 = smul.addr %s1116, 4
        %s1118 = scalar_lea.vmem %s4, %s1117
      $region56: #{conv3d_bn_act.1} parent=51 // pred_fallthru
        _
    $region52: #{conv3d_bn_act.1} parent=5 // pred_fallthru
      _
  $region6: #{conv3d_bn_act.1} parent=0 // loop_footer
    %s14 = sadd.s32 1, %s10
  $region7: #{conv3d_bn_act.1} parent=0 // loop_footer_branch
    %9 = sbr.rel target = $region3
  $region8: #{conv3d_bn_act.1} parent=0 // loop_exit
    _

</llo_original>
